<compile_context>
chip_gen: v5e
topology: v5e:2x2
jax: 0.10.0
libtpu: 0.0.40
codegen_flags: <defaults>
</compile_context>

<pallas_src>
import functools

import numpy as np

import jax
import jax.numpy as jnp
from jax.experimental import pallas as pl
from jax.experimental.pallas import tpu as pltpu


def _sigmoid(x):
    # Exact sigmoid via tanh: runs on the EUP, no divide occupying the VALU.
    return 0.5 * (jnp.tanh(0.5 * x) + 1.0)


def _ca_relu(h, w1, b1, w2, b2, inv_hw):
    """CALayer (avg-pool -> 1x1 -> relu -> 1x1 -> sigmoid -> scale) + outer relu.

    Channel-major: h is (C, hw); pooled/mid/scale are column vectors.
    """
    pooled = jnp.sum(h, axis=1, keepdims=True) * inv_hw                        # (C, 1)
    mid = jnp.maximum(
        jnp.dot(w1, pooled, preferred_element_type=jnp.float32) + b1, 0.0)     # (cr, 1)
    y = _sigmoid(jnp.dot(w2, mid, preferred_element_type=jnp.float32) + b2)    # (C, 1)
    return jnp.maximum(h * y, 0.0)


def _conv_taps(a, mask_ref, K, dil, H, W):
    """K*K shifted+border-masked copies of a (rows, H*W) activation (f32).

    Tap order is (ky, kx) row-major, matching the packed weight layout.
    Shifts are static concat/slice (unambiguous semantics); invalid positions
    (zero 'same' padding) are zeroed via the precomputed mask rows.
    """
    pad = dil * (K - 1) // 2
    rows = a.shape[0]
    out = []
    for ky in range(K):
        for kx in range(K):
            s = (ky * dil - pad) * W + (kx * dil - pad)      # flat source offset
            if s > 0:
                sh = jnp.concatenate(
                    [a[:, s:], jnp.zeros((rows, s), a.dtype)], axis=1)
            elif s < 0:
                sh = jnp.concatenate(
                    [jnp.zeros((rows, -s), a.dtype), a[:, :s]], axis=1)
            else:
                sh = a
            m = mask_ref[ky * K + kx]                         # (1, hw) f32 {0,1}
            out.append(jnp.where(m > 0.0, sh, 0.0))
    return out                                                # list of (rows, hw) f32


# ----------------------------------------------------------------------------
# Kernels (grid=(B,); each grid step processes one batch element).
# ----------------------------------------------------------------------------
def _init_kernel(x_ref, mx_ref, w_ref, b_ref, w1_ref, b1_ref, w2_ref, b2_ref,
                 out_ref, *, K, dil, H, W, C, inv_hw):
    # h is None branch: h = sigmoid(conv_xz(x)) * tanh(conv_xn(x)); CA; relu.
    x = x_ref[0]                                              # (cin, hw) f32
    patches = jnp.concatenate(_conv_taps(x, mx_ref, K, dil, H, W),
                              axis=0).astype(jnp.bfloat16)    # (K*K*cin, hw)
    g = jnp.dot(w_ref[...], patches,
                preferred_element_type=jnp.float32) + b_ref[...]   # (2C, hw)
    h = _sigmoid(g[0:C, :]) * jnp.tanh(g[C:2 * C, :])
    out_ref[0] = _ca_relu(h, w1_ref[...], b1_ref[...], w2_ref[...], b2_ref[...],
                          inv_hw)


def _step_kernel(x_ref, h_ref, mx_ref, mh_ref, w_ref, b_ref, whn_ref, bhn_ref,
                 w1_ref, b1_ref, w2_ref, b2_ref, out_ref,
                 *, K, dil, H, W, C, inv_hw):
    # Fully fused recurrent step: all gate convs (one wide matmul), r*h,
    # in-kernel n-gate conv, GRU update, CALayer, relu — one HBM write.
    x = x_ref[0]                                              # (cin, hw) f32
    h = h_ref[0]                                              # (C,   hw) f32

    # Wide dot: rows [z | r | n] ; contraction over x-patches then h-patches.
    patches = jnp.concatenate(
        _conv_taps(x, mx_ref, K, dil, H, W) + _conv_taps(h, mh_ref, K, 1, H, W),
        axis=0).astype(jnp.bfloat16)                          # (K*K*(cin+C), hw)
    g = jnp.dot(w_ref[...], patches,
                preferred_element_type=jnp.float32) + b_ref[...]   # (3C, hw)

    z = _sigmoid(g[0:C, :])
    r = _sigmoid(g[C:2 * C, :])

    rh = r * h                                                # (C, hw) f32
    prh = jnp.concatenate(_conv_taps(rh, mh_ref, K, 1, H, W),
                          axis=0).astype(jnp.bfloat16)        # (K*K*C, hw)
    nh = jnp.dot(whn_ref[...], prh,
                 preferred_element_type=jnp.float32) + bhn_ref[...]  # (C, hw)
    n = jnp.tanh(g[2 * C:3 * C, :] + nh)

    h_new = (1.0 - z) * h + z * n
    out_ref[0] = _ca_relu(h_new, w1_ref[...], b1_ref[...], w2_ref[...],
                          b2_ref[...], inv_hw)


# ----------------------------------------------------------------------------
# BlockSpec / wrapper helpers.
# ----------------------------------------------------------------------------
def _batched_spec(shape):
    n = len(shape)
    return pl.BlockSpec((1,) + tuple(shape), lambda b, _n=n: (b,) + (0,) * _n)


def _full_spec(arr):
    n = arr.ndim
    return pl.BlockSpec(arr.shape, lambda b, _n=n: (0,) * _n)


def _nbytes(a):
    return a.size * a.dtype.itemsize


def _compiler_params(step_bytes):
    # Generation-aware VMEM limit: ~3/4 of physical capacity (96 MiB on
    # v5e/v6e, 48 MiB on v7x), floored at 32 MiB (> v5e's 16 MiB default).
    try:
        cap = int(pltpu.get_tpu_info().vmem_capacity_bytes)
    except Exception:  # pragma: no cover - conservative fallback
        cap = 64 << 20
    limit = min(max(4 * int(step_bytes) + (8 << 20), 32 << 20), (cap * 3) // 4)
    return pltpu.CompilerParams(dimension_semantics=("parallel",),
                                vmem_limit_bytes=int(limit))


def _border_mask(H, W, K, dil):
    """(K*K, 1, H*W) f32 {0,1} validity mask per conv tap ('same' zero pad)."""
    pad = dil * (K - 1) // 2
    ys = np.arange(H)[:, None]
    xs = np.arange(W)[None, :]
    m = np.zeros((K * K, 1, H * W), np.float32)
    for ky in range(K):
        for kx in range(K):
            dy, dx = ky * dil - pad, kx * dil - pad
            ok = (ys + dy >= 0) & (ys + dy < H) & (xs + dx >= 0) & (xs + dx < W)
            m[ky * K + kx, 0] = ok.reshape(-1).astype(np.float32)
    return jnp.asarray(m)


# ----------------------------------------------------------------------------
# ConvGRU forward (PyTorch-equivalent).  Accepts / returns NCHW tensors.
# ----------------------------------------------------------------------------
@functools.partial(jax.jit, static_argnames=("dilation", "kernel_size"))
def conv_gru_forward(pp, x_nchw, h_nchw=None, *, dilation=1, kernel_size=3):
    """pp = prepare_params(init_params(...)). x/h are NCHW f32. Returns (h, h)."""
    K = kernel_size
    assert K % 2 == 1, "kernel_size must be odd to reproduce PyTorch 'same' pad"
    C = pp["w_n"].shape[0]
    B, cin, H, W = x_nchw.shape
    hw = H * W
    inv_hw = 1.0 / hw

    x = x_nchw.reshape(B, cin, hw).astype(jnp.float32)        # free reshape (NCHW)
    mx = _border_mask(H, W, K, dilation)

    ca_args = (pp["w_ca1"], pp["b_ca1"], pp["w_ca2"], pp["b_ca2"])
    ca_specs = [_full_spec(a) for a in ca_args]
    w_ca_bytes = sum(_nbytes(a) for a in ca_args)
    out_shape = jax.ShapeDtypeStruct((B, C, hw), jnp.float32)
    out_spec = _batched_spec((C, hw))

    if h_nchw is None:
        step = (4 * hw * (cin + 6 * K * K * cin + 6 * C) + _nbytes(mx)
                + _nbytes(pp["w_i"]) + _nbytes(pp["b_i"]) + w_ca_bytes)
        out = pl.pallas_call(
            functools.partial(_init_kernel, K=K, dil=dilation, H=H, W=W,
                              C=C, inv_hw=inv_hw),
            out_shape=out_shape,
            grid=(B,),
            in_specs=[_batched_spec((cin, hw)), _full_spec(mx),
                      _full_spec(pp["w_i"]), _full_spec(pp["b_i"]), *ca_specs],
            out_specs=out_spec,
            compiler_params=_compiler_params(step),
        )(x, mx, pp["w_i"], pp["b_i"], *ca_args)
    else:
        h = h_nchw.reshape(B, C, hw).astype(jnp.float32)      # free reshape
        mh = _border_mask(H, W, K, 1)
        kk = K * K * (cin + C)
        step = (4 * hw * (cin + C + 6 * kk + 6 * K * K * C + 12 * C)
                + _nbytes(mx) + _nbytes(mh) + w_ca_bytes
                + _nbytes(pp["w_g"]) + _nbytes(pp["b_g"])
                + _nbytes(pp["w_n"]) + _nbytes(pp["b_n"]))
        out = pl.pallas_call(
            functools.partial(_step_kernel, K=K, dil=dilation, H=H, W=W,
                              C=C, inv_hw=inv_hw),
            out_shape=out_shape,
            grid=(B,),
            in_specs=[_batched_spec((cin, hw)), _batched_spec((C, hw)),
                      _full_spec(mx), _full_spec(mh),
                      _full_spec(pp["w_g"]), _full_spec(pp["b_g"]),
                      _full_spec(pp["w_n"]), _full_spec(pp["b_n"]), *ca_specs],
            out_specs=out_spec,
            compiler_params=_compiler_params(step),
        )(x, h, mx, mh, pp["w_g"], pp["b_g"], pp["w_n"], pp["b_n"], *ca_args)

    h_new = out.reshape(B, C, H, W)                           # free reshape to NCHW
    return h_new, h_new


# ----------------------------------------------------------------------------
# Parameters: raw (HWIO convs, PyTorch-equivalent) + one-time packed layout.
# ----------------------------------------------------------------------------
def init_params(key, inp_dim, oup_dim, kernel):
    reduction = oup_dim // 4
    cr = oup_dim // reduction                                 # CALayer mid channels
    ks = jax.random.split(key, 16)

    def w(k, shape, fan_in):
        return jax.random.normal(k, shape, jnp.float32) / jnp.sqrt(float(fan_in))

    fan_x = inp_dim * kernel * kernel
    fan_h = oup_dim * kernel * kernel
    return {
        "w_xz": w(ks[0], (kernel, kernel, inp_dim, oup_dim), fan_x),
        "b_xz": w(ks[1], (oup_dim,), fan_x),
        "w_xr": w(ks[2], (kernel, kernel, inp_dim, oup_dim), fan_x),
        "b_xr": w(ks[3], (oup_dim,), fan_x),
        "w_xn": w(ks[4], (kernel, kernel, inp_dim, oup_dim), fan_x),
        "b_xn": w(ks[5], (oup_dim,), fan_x),
        "w_hz": w(ks[6], (kernel, kernel, oup_dim, oup_dim), fan_h),
        "b_hz": w(ks[7], (oup_dim,), fan_h),
        "w_hr": w(ks[8], (kernel, kernel, oup_dim, oup_dim), fan_h),
        "b_hr": w(ks[9], (oup_dim,), fan_h),
        "w_hn": w(ks[10], (kernel, kernel, oup_dim, oup_dim), fan_h),
        "b_hn": w(ks[11], (oup_dim,), fan_h),
        "w_ca1": w(ks[12], (oup_dim, cr), oup_dim),
        "b_ca1": w(ks[13], (cr,), oup_dim),
        "w_ca2": w(ks[14], (cr, oup_dim), cr),
        "b_ca2": w(ks[15], (oup_dim,), cr),
    }


def prepare_params(p):
    """One-time packing into channel-major, gate-concatenated matmul weights."""
    K, _, cin, C = p["w_xz"].shape
    cr = p["w_ca1"].shape[1]

    def cm(name):
        # HWIO (K,K,I,O) -> channel-major (O, K*K*I) bf16, tap order (ky,kx,i).
        w = p[name]
        return jnp.transpose(w.reshape(K * K * w.shape[2], C)).astype(jnp.bfloat16)

    zeros_h = jnp.zeros((C, K * K * C), jnp.bfloat16)
    w_g = jnp.concatenate([                                   # (3C, K*K*(cin+C))
        jnp.concatenate([cm("w_xz"), cm("w_hz")], axis=1),
        jnp.concatenate([cm("w_xr"), cm("w_hr")], axis=1),
        jnp.concatenate([cm("w_xn"), zeros_h], axis=1),       # n: x-part only
    ], axis=0)
    b_g = jnp.concatenate([p["b_xz"] + p["b_hz"],
                           p["b_xr"] + p["b_hr"],
                           p["b_xn"]]).reshape(3 * C, 1).astype(jnp.float32)
    w_i = jnp.concatenate([cm("w_xz"), cm("w_xn")], axis=0)   # (2C, K*K*cin)
    b_i = jnp.concatenate([p["b_xz"], p["b_xn"]]).reshape(2 * C, 1).astype(jnp.float32)
    return {
        "w_g": w_g, "b_g": b_g,
        "w_i": w_i, "b_i": b_i,
        "w_n": cm("w_hn"),                                    # (C, K*K*C)
        "b_n": p["b_hn"].reshape(C, 1).astype(jnp.float32),
        "w_ca1": jnp.transpose(p["w_ca1"]).astype(jnp.float32),   # (cr, C)
        "b_ca1": p["b_ca1"].reshape(cr, 1).astype(jnp.float32),
        "w_ca2": jnp.transpose(p["w_ca2"]).astype(jnp.float32),   # (C, cr)
        "b_ca2": p["b_ca2"].reshape(C, 1).astype(jnp.float32),
    }


# ----------------------------------------------------------------------------
# Pure-JAX f32 reference (matches the PyTorch forward) for a sanity check.
# ----------------------------------------------------------------------------
def _conv_ref(x_nhwc, w, b, dil):
    y = jax.lax.conv_general_dilated(
        x_nhwc, w, window_strides=(1, 1), padding="SAME",
        rhs_dilation=(dil, dil), dimension_numbers=("NHWC", "HWIO", "NHWC"))
    return y + b


def conv_gru_reference(p, x_nchw, h_nchw=None, *, dilation=1):
    x = jnp.transpose(x_nchw, (0, 2, 3, 1))
    if h_nchw is None:
        z = jax.nn.sigmoid(_conv_ref(x, p["w_xz"], p["b_xz"], dilation))
        f = jnp.tanh(_conv_ref(x, p["w_xn"], p["b_xn"], dilation))
        h = z * f
    else:
        hp = jnp.transpose(h_nchw, (0, 2, 3, 1))
        z = jax.nn.sigmoid(_conv_ref(x, p["w_xz"], p["b_xz"], dilation)
                           + _conv_ref(hp, p["w_hz"], p["b_hz"], 1))
        r = jax.nn.sigmoid(_conv_ref(x, p["w_xr"], p["b_xr"], dilation)
                           + _conv_ref(hp, p["w_hr"], p["b_hr"], 1))
        n = jnp.tanh(_conv_ref(x, p["w_xn"], p["b_xn"], dilation)
                     + _conv_ref(r * hp, p["w_hn"], p["b_hn"], 1))
        h = (1.0 - z) * hp + z * n
    y = jnp.mean(h, axis=(1, 2), keepdims=True)
    y = jnp.maximum(jnp.einsum("bijc,cm->bijm", y, p["w_ca1"]) + p["b_ca1"], 0.0)
    y = jax.nn.sigmoid(jnp.einsum("bijm,mc->bijc", y, p["w_ca2"]) + p["b_ca2"])
    h = jnp.maximum(h * y, 0.0)
    h = jnp.transpose(h, (0, 3, 1, 2))
    return h, h


if __name__ == "__main__":
    B, INP, OUP, H, W = 2, 4, 8, 16, 16
    KERNEL, DILATION = 3, 1

    key = jax.random.PRNGKey(0)
    kp, kx1, kx2 = jax.random.split(key, 3)
    raw = init_params(kp, INP, OUP, KERNEL)
    params = prepare_params(raw)

    x1 = jax.random.normal(kx1, (B, INP, H, W), jnp.float32)  # PyTorch NCHW input
    x2 = jax.random.normal(kx2, (B, INP, H, W), jnp.float32)

    # Step 1: h is None branch.  Step 2: recurrent branch with previous state.
    h1, _ = conv_gru_forward(params, x1, None, dilation=DILATION, kernel_size=KERNEL)
    h2, _ = conv_gru_forward(params, x2, h1, dilation=DILATION, kernel_size=KERNEL)
    jax.block_until_ready((h1, h2))
    assert h1.shape == (B, OUP, H, W) and h2.shape == (B, OUP, H, W)

    # f32 reference check (loose tolerance: conv inputs/weights are bf16).
    r1, _ = conv_gru_reference(raw, x1, None, dilation=DILATION)
    r2, _ = conv_gru_reference(raw, x2, r1, dilation=DILATION)
    err = max(float(jnp.max(jnp.abs(h1 - r1))), float(jnp.max(jnp.abs(h2 - r2))))
    assert err < 8e-2, f"max abs error vs f32 reference too large: {err}"

    print("KERNEL_OK")
</pallas_src>

<mosaic_0001>
module attributes {stable_mosaic.version = 11 : i64} {
  func.func @_init_kernel(%arg0: i32, %arg1: memref<1x4x256xf32, #tpu.memory_space<vmem>>, %arg2: memref<9x1x256xf32, #tpu.memory_space<vmem>>, %arg3: memref<16x36xbf16, #tpu.memory_space<vmem>>, %arg4: memref<16x1xf32, #tpu.memory_space<vmem>>, %arg5: memref<4x8xf32, #tpu.memory_space<vmem>>, %arg6: memref<4x1xf32, #tpu.memory_space<vmem>>, %arg7: memref<8x4xf32, #tpu.memory_space<vmem>>, %arg8: memref<8x1xf32, #tpu.memory_space<vmem>>, %arg9: memref<1x8x256xf32, #tpu.memory_space<vmem>>) attributes {dimension_semantics = [#tpu.dimension_semantics<parallel>], iteration_bounds = array<i64: 2>, scalar_prefetch = 0 : i64, scratch_operands = 0 : i64, tpu.core_type = #tpu.core_type<tc>, window_params = [{transform_indices = @transform_0, window_bounds = array<i64: 1, 4, 256>}, {pipeline_mode = #tpu.pipeline_mode<synchronous>, transform_indices = @transform_1, window_bounds = array<i64: 9, 1, 256>}, {pipeline_mode = #tpu.pipeline_mode<synchronous>, transform_indices = @transform_2, window_bounds = array<i64: 16, 36>}, {pipeline_mode = #tpu.pipeline_mode<synchronous>, transform_indices = @transform_3, window_bounds = array<i64: 16, 1>}, {pipeline_mode = #tpu.pipeline_mode<synchronous>, transform_indices = @transform_4, window_bounds = array<i64: 4, 8>}, {pipeline_mode = #tpu.pipeline_mode<synchronous>, transform_indices = @transform_5, window_bounds = array<i64: 4, 1>}, {pipeline_mode = #tpu.pipeline_mode<synchronous>, transform_indices = @transform_6, window_bounds = array<i64: 8, 4>}, {pipeline_mode = #tpu.pipeline_mode<synchronous>, transform_indices = @transform_7, window_bounds = array<i64: 8, 1>}, {transform_indices = @transform_8, window_bounds = array<i64: 1, 8, 256>}]} {
    %c0 = arith.constant 0 : index
    %c0_0 = arith.constant 0 : index
    %c0_1 = arith.constant 0 : index
    %0 = vector.load %arg1[%c0, %c0_0, %c0_1] : memref<1x4x256xf32, #tpu.memory_space<vmem>>, vector<1x4x256xf32>
    %1 = vector.shape_cast %0 : vector<1x4x256xf32> to vector<4x256xf32>
    %cst = arith.constant 0.000000e+00 : f32
    %2 = vector.broadcast %cst : f32 to vector<4x17xf32>
    %3 = vector.extract_strided_slice %1 {offsets = [0, 0], sizes = [4, 239], strides = [1, 1]} : vector<4x256xf32> to vector<4x239xf32>
    %4 = tpu.concatenate %2, %3 in 1 : vector<4x17xf32>, vector<4x239xf32> -> vector<4x256xf32>
    %c0_2 = arith.constant 0 : index
    %c0_3 = arith.constant 0 : index
    %c0_4 = arith.constant 0 : index
    %5 = vector.load %arg2[%c0_2, %c0_3, %c0_4] : memref<9x1x256xf32, #tpu.memory_space<vmem>>, vector<1x1x256xf32>
    %6 = vector.shape_cast %5 : vector<1x1x256xf32> to vector<1x256xf32>
    %cst_5 = arith.constant 0.000000e+00 : f32
    %7 = vector.broadcast %cst_5 : f32 to vector<1x256xf32>
    %8 = arith.cmpf ogt, %6, %7 : vector<1x256xf32>
    %cst_6 = arith.constant 0.000000e+00 : f32
    %9 = vector.shape_cast %8 : vector<1x256xi1> to vector<1x256xi1>
    %10 = vector.broadcast %9 : vector<1x256xi1> to vector<4x256xi1>
    %11 = vector.broadcast %cst_6 : f32 to vector<4x256xf32>
    %12 = arith.select %10, %4, %11 : vector<4x256xi1>, vector<4x256xf32>
    %cst_7 = arith.constant 0.000000e+00 : f32
    %13 = vector.broadcast %cst_7 : f32 to vector<4x16xf32>
    %14 = vector.extract_strided_slice %1 {offsets = [0, 0], sizes = [4, 240], strides = [1, 1]} : vector<4x256xf32> to vector<4x240xf32>
    %15 = tpu.concatenate %13, %14 in 1 : vector<4x16xf32>, vector<4x240xf32> -> vector<4x256xf32>
    %c1 = arith.constant 1 : index
    %c0_8 = arith.constant 0 : index
    %c0_9 = arith.constant 0 : index
    %16 = vector.load %arg2[%c1, %c0_8, %c0_9] : memref<9x1x256xf32, #tpu.memory_space<vmem>>, vector<1x1x256xf32>
    %17 = vector.shape_cast %16 : vector<1x1x256xf32> to vector<1x256xf32>
    %cst_10 = arith.constant 0.000000e+00 : f32
    %18 = vector.broadcast %cst_10 : f32 to vector<1x256xf32>
    %19 = arith.cmpf ogt, %17, %18 : vector<1x256xf32>
    %cst_11 = arith.constant 0.000000e+00 : f32
    %20 = vector.shape_cast %19 : vector<1x256xi1> to vector<1x256xi1>
    %21 = vector.broadcast %20 : vector<1x256xi1> to vector<4x256xi1>
    %22 = vector.broadcast %cst_11 : f32 to vector<4x256xf32>
    %23 = arith.select %21, %15, %22 : vector<4x256xi1>, vector<4x256xf32>
    %cst_12 = arith.constant 0.000000e+00 : f32
    %24 = vector.broadcast %cst_12 : f32 to vector<4x15xf32>
    %25 = vector.extract_strided_slice %1 {offsets = [0, 0], sizes = [4, 241], strides = [1, 1]} : vector<4x256xf32> to vector<4x241xf32>
    %26 = tpu.concatenate %24, %25 in 1 : vector<4x15xf32>, vector<4x241xf32> -> vector<4x256xf32>
    %c2 = arith.constant 2 : index
    %c0_13 = arith.constant 0 : index
    %c0_14 = arith.constant 0 : index
    %27 = vector.load %arg2[%c2, %c0_13, %c0_14] : memref<9x1x256xf32, #tpu.memory_space<vmem>>, vector<1x1x256xf32>
    %28 = vector.shape_cast %27 : vector<1x1x256xf32> to vector<1x256xf32>
    %cst_15 = arith.constant 0.000000e+00 : f32
    %29 = vector.broadcast %cst_15 : f32 to vector<1x256xf32>
    %30 = arith.cmpf ogt, %28, %29 : vector<1x256xf32>
    %cst_16 = arith.constant 0.000000e+00 : f32
    %31 = vector.shape_cast %30 : vector<1x256xi1> to vector<1x256xi1>
    %32 = vector.broadcast %31 : vector<1x256xi1> to vector<4x256xi1>
    %33 = vector.broadcast %cst_16 : f32 to vector<4x256xf32>
    %34 = arith.select %32, %26, %33 : vector<4x256xi1>, vector<4x256xf32>
    %cst_17 = arith.constant 0.000000e+00 : f32
    %35 = vector.broadcast %cst_17 : f32 to vector<4x1xf32>
    %36 = vector.extract_strided_slice %1 {offsets = [0, 0], sizes = [4, 255], strides = [1, 1]} : vector<4x256xf32> to vector<4x255xf32>
    %37 = tpu.concatenate %35, %36 in 1 : vector<4x1xf32>, vector<4x255xf32> -> vector<4x256xf32>
    %c3 = arith.constant 3 : index
    %c0_18 = arith.constant 0 : index
    %c0_19 = arith.constant 0 : index
    %38 = vector.load %arg2[%c3, %c0_18, %c0_19] : memref<9x1x256xf32, #tpu.memory_space<vmem>>, vector<1x1x256xf32>
    %39 = vector.shape_cast %38 : vector<1x1x256xf32> to vector<1x256xf32>
    %cst_20 = arith.constant 0.000000e+00 : f32
    %40 = vector.broadcast %cst_20 : f32 to vector<1x256xf32>
    %41 = arith.cmpf ogt, %39, %40 : vector<1x256xf32>
    %cst_21 = arith.constant 0.000000e+00 : f32
    %42 = vector.shape_cast %41 : vector<1x256xi1> to vector<1x256xi1>
    %43 = vector.broadcast %42 : vector<1x256xi1> to vector<4x256xi1>
    %44 = vector.broadcast %cst_21 : f32 to vector<4x256xf32>
    %45 = arith.select %43, %37, %44 : vector<4x256xi1>, vector<4x256xf32>
    %c4 = arith.constant 4 : index
    %c0_22 = arith.constant 0 : index
    %c0_23 = arith.constant 0 : index
    %46 = vector.load %arg2[%c4, %c0_22, %c0_23] : memref<9x1x256xf32, #tpu.memory_space<vmem>>, vector<1x1x256xf32>
    %47 = vector.shape_cast %46 : vector<1x1x256xf32> to vector<1x256xf32>
    %cst_24 = arith.constant 0.000000e+00 : f32
    %48 = vector.broadcast %cst_24 : f32 to vector<1x256xf32>
    %49 = arith.cmpf ogt, %47, %48 : vector<1x256xf32>
    %cst_25 = arith.constant 0.000000e+00 : f32
    %50 = vector.shape_cast %49 : vector<1x256xi1> to vector<1x256xi1>
    %51 = vector.broadcast %50 : vector<1x256xi1> to vector<4x256xi1>
    %52 = vector.broadcast %cst_25 : f32 to vector<4x256xf32>
    %53 = arith.select %51, %1, %52 : vector<4x256xi1>, vector<4x256xf32>
    %54 = vector.extract_strided_slice %1 {offsets = [0, 1], sizes = [4, 255], strides = [1, 1]} : vector<4x256xf32> to vector<4x255xf32>
    %cst_26 = arith.constant 0.000000e+00 : f32
    %55 = vector.broadcast %cst_26 : f32 to vector<4x1xf32>
    %56 = tpu.concatenate %54, %55 in 1 : vector<4x255xf32>, vector<4x1xf32> -> vector<4x256xf32>
    %c5 = arith.constant 5 : index
    %c0_27 = arith.constant 0 : index
    %c0_28 = arith.constant 0 : index
    %57 = vector.load %arg2[%c5, %c0_27, %c0_28] : memref<9x1x256xf32, #tpu.memory_space<vmem>>, vector<1x1x256xf32>
    %58 = vector.shape_cast %57 : vector<1x1x256xf32> to vector<1x256xf32>
    %cst_29 = arith.constant 0.000000e+00 : f32
    %59 = vector.broadcast %cst_29 : f32 to vector<1x256xf32>
    %60 = arith.cmpf ogt, %58, %59 : vector<1x256xf32>
    %cst_30 = arith.constant 0.000000e+00 : f32
    %61 = vector.shape_cast %60 : vector<1x256xi1> to vector<1x256xi1>
    %62 = vector.broadcast %61 : vector<1x256xi1> to vector<4x256xi1>
    %63 = vector.broadcast %cst_30 : f32 to vector<4x256xf32>
    %64 = arith.select %62, %56, %63 : vector<4x256xi1>, vector<4x256xf32>
    %65 = vector.extract_strided_slice %1 {offsets = [0, 15], sizes = [4, 241], strides = [1, 1]} : vector<4x256xf32> to vector<4x241xf32>
    %cst_31 = arith.constant 0.000000e+00 : f32
    %66 = vector.broadcast %cst_31 : f32 to vector<4x15xf32>
    %67 = tpu.concatenate %65, %66 in 1 : vector<4x241xf32>, vector<4x15xf32> -> vector<4x256xf32>
    %c6 = arith.constant 6 : index
    %c0_32 = arith.constant 0 : index
    %c0_33 = arith.constant 0 : index
    %68 = vector.load %arg2[%c6, %c0_32, %c0_33] : memref<9x1x256xf32, #tpu.memory_space<vmem>>, vector<1x1x256xf32>
    %69 = vector.shape_cast %68 : vector<1x1x256xf32> to vector<1x256xf32>
    %cst_34 = arith.constant 0.000000e+00 : f32
    %70 = vector.broadcast %cst_34 : f32 to vector<1x256xf32>
    %71 = arith.cmpf ogt, %69, %70 : vector<1x256xf32>
    %cst_35 = arith.constant 0.000000e+00 : f32
    %72 = vector.shape_cast %71 : vector<1x256xi1> to vector<1x256xi1>
    %73 = vector.broadcast %72 : vector<1x256xi1> to vector<4x256xi1>
    %74 = vector.broadcast %cst_35 : f32 to vector<4x256xf32>
    %75 = arith.select %73, %67, %74 : vector<4x256xi1>, vector<4x256xf32>
    %76 = vector.extract_strided_slice %1 {offsets = [0, 16], sizes = [4, 240], strides = [1, 1]} : vector<4x256xf32> to vector<4x240xf32>
    %cst_36 = arith.constant 0.000000e+00 : f32
    %77 = vector.broadcast %cst_36 : f32 to vector<4x16xf32>
    %78 = tpu.concatenate %76, %77 in 1 : vector<4x240xf32>, vector<4x16xf32> -> vector<4x256xf32>
    %c7 = arith.constant 7 : index
    %c0_37 = arith.constant 0 : index
    %c0_38 = arith.constant 0 : index
    %79 = vector.load %arg2[%c7, %c0_37, %c0_38] : memref<9x1x256xf32, #tpu.memory_space<vmem>>, vector<1x1x256xf32>
    %80 = vector.shape_cast %79 : vector<1x1x256xf32> to vector<1x256xf32>
    %cst_39 = arith.constant 0.000000e+00 : f32
    %81 = vector.broadcast %cst_39 : f32 to vector<1x256xf32>
    %82 = arith.cmpf ogt, %80, %81 : vector<1x256xf32>
    %cst_40 = arith.constant 0.000000e+00 : f32
    %83 = vector.shape_cast %82 : vector<1x256xi1> to vector<1x256xi1>
    %84 = vector.broadcast %83 : vector<1x256xi1> to vector<4x256xi1>
    %85 = vector.broadcast %cst_40 : f32 to vector<4x256xf32>
    %86 = arith.select %84, %78, %85 : vector<4x256xi1>, vector<4x256xf32>
    %87 = vector.extract_strided_slice %1 {offsets = [0, 17], sizes = [4, 239], strides = [1, 1]} : vector<4x256xf32> to vector<4x239xf32>
    %cst_41 = arith.constant 0.000000e+00 : f32
    %88 = vector.broadcast %cst_41 : f32 to vector<4x17xf32>
    %89 = tpu.concatenate %87, %88 in 1 : vector<4x239xf32>, vector<4x17xf32> -> vector<4x256xf32>
    %c8 = arith.constant 8 : index
    %c0_42 = arith.constant 0 : index
    %c0_43 = arith.constant 0 : index
    %90 = vector.load %arg2[%c8, %c0_42, %c0_43] : memref<9x1x256xf32, #tpu.memory_space<vmem>>, vector<1x1x256xf32>
    %91 = vector.shape_cast %90 : vector<1x1x256xf32> to vector<1x256xf32>
    %cst_44 = arith.constant 0.000000e+00 : f32
    %92 = vector.broadcast %cst_44 : f32 to vector<1x256xf32>
    %93 = arith.cmpf ogt, %91, %92 : vector<1x256xf32>
    %cst_45 = arith.constant 0.000000e+00 : f32
    %94 = vector.shape_cast %93 : vector<1x256xi1> to vector<1x256xi1>
    %95 = vector.broadcast %94 : vector<1x256xi1> to vector<4x256xi1>
    %96 = vector.broadcast %cst_45 : f32 to vector<4x256xf32>
    %97 = arith.select %95, %89, %96 : vector<4x256xi1>, vector<4x256xf32>
    %98 = tpu.concatenate %12, %23, %34, %45, %53, %64, %75, %86, %97 in 0 : vector<4x256xf32>, vector<4x256xf32>, vector<4x256xf32>, vector<4x256xf32>, vector<4x256xf32>, vector<4x256xf32>, vector<4x256xf32>, vector<4x256xf32>, vector<4x256xf32> -> vector<36x256xf32>
    %99 = arith.truncf %98 : vector<36x256xf32> to vector<36x256xbf16>
    %c0_46 = arith.constant 0 : index
    %c0_47 = arith.constant 0 : index
    %100 = vector.load %arg3[%c0_46, %c0_47] : memref<16x36xbf16, #tpu.memory_space<vmem>>, vector<16x36xbf16>
    %cst_48 = arith.constant dense<0.000000e+00> : vector<16x256xf32>
    %101 = tpu.matmul %100, %99, %cst_48 {dimension_numbers = #tpu.dot_dimension_numbers<[1], [0], [0], [1], [0, 0, 1, 1], [], []>} : vector<16x36xbf16>, vector<36x256xbf16>, vector<16x256xf32> -> vector<16x256xf32>
    %c0_49 = arith.constant 0 : index
    %c0_50 = arith.constant 0 : index
    %102 = vector.load %arg4[%c0_49, %c0_50] : memref<16x1xf32, #tpu.memory_space<vmem>>, vector<16x1xf32>
    %103 = vector.broadcast %102 : vector<16x1xf32> to vector<16x256xf32>
    %104 = arith.addf %101, %103 : vector<16x256xf32>
    %105 = vector.extract_strided_slice %104 {offsets = [0, 0], sizes = [8, 256], strides = [1, 1]} : vector<16x256xf32> to vector<8x256xf32>
    %cst_51 = arith.constant 5.000000e-01 : f32
    %106 = vector.broadcast %cst_51 : f32 to vector<8x256xf32>
    %107 = arith.mulf %106, %105 : vector<8x256xf32>
    %108 = math.tanh %107 : vector<8x256xf32>
    %cst_52 = arith.constant 1.000000e+00 : f32
    %109 = vector.broadcast %cst_52 : f32 to vector<8x256xf32>
    %110 = arith.addf %108, %109 : vector<8x256xf32>
    %cst_53 = arith.constant 5.000000e-01 : f32
    %111 = vector.broadcast %cst_53 : f32 to vector<8x256xf32>
    %112 = arith.mulf %111, %110 : vector<8x256xf32>
    %113 = vector.extract_strided_slice %104 {offsets = [8, 0], sizes = [8, 256], strides = [1, 1]} : vector<16x256xf32> to vector<8x256xf32>
    %114 = math.tanh %113 : vector<8x256xf32>
    %115 = arith.mulf %112, %114 : vector<8x256xf32>
    %c0_54 = arith.constant 0 : index
    %c0_55 = arith.constant 0 : index
    %116 = vector.load %arg5[%c0_54, %c0_55] : memref<4x8xf32, #tpu.memory_space<vmem>>, vector<4x8xf32>
    %c0_56 = arith.constant 0 : index
    %c0_57 = arith.constant 0 : index
    %117 = vector.load %arg6[%c0_56, %c0_57] : memref<4x1xf32, #tpu.memory_space<vmem>>, vector<4x1xf32>
    %c0_58 = arith.constant 0 : index
    %c0_59 = arith.constant 0 : index
    %118 = vector.load %arg7[%c0_58, %c0_59] : memref<8x4xf32, #tpu.memory_space<vmem>>, vector<8x4xf32>
    %c0_60 = arith.constant 0 : index
    %c0_61 = arith.constant 0 : index
    %119 = vector.load %arg8[%c0_60, %c0_61] : memref<8x1xf32, #tpu.memory_space<vmem>>, vector<8x1xf32>
    %cst_62 = arith.constant dense<0.000000e+00> : vector<8xf32>
    %120 = vector.multi_reduction <add>, %115, %cst_62 [1] : vector<8x256xf32> to vector<8xf32>
    %121 = vector.shape_cast %120 : vector<8xf32> to vector<8x1xf32>
    %cst_63 = arith.constant 3.906250e-03 : f32
    %122 = vector.broadcast %cst_63 : f32 to vector<8x1xf32>
    %123 = arith.mulf %121, %122 : vector<8x1xf32>
    %cst_64 = arith.constant dense<0.000000e+00> : vector<4x1xf32>
    %124 = tpu.matmul %116, %123, %cst_64 {dimension_numbers = #tpu.dot_dimension_numbers<[1], [0], [0], [1], [0, 0, 1, 1], [], []>} : vector<4x8xf32>, vector<8x1xf32>, vector<4x1xf32> -> vector<4x1xf32>
    %125 = arith.addf %124, %117 : vector<4x1xf32>
    %cst_65 = arith.constant 0.000000e+00 : f32
    %126 = vector.broadcast %cst_65 : f32 to vector<4x1xf32>
    %127 = arith.maximumf %125, %126 : vector<4x1xf32>
    %cst_66 = arith.constant dense<0.000000e+00> : vector<8x1xf32>
    %128 = tpu.matmul %118, %127, %cst_66 {dimension_numbers = #tpu.dot_dimension_numbers<[1], [0], [0], [1], [0, 0, 1, 1], [], []>} : vector<8x4xf32>, vector<4x1xf32>, vector<8x1xf32> -> vector<8x1xf32>
    %129 = arith.addf %128, %119 : vector<8x1xf32>
    %cst_67 = arith.constant 5.000000e-01 : f32
    %130 = vector.broadcast %cst_67 : f32 to vector<8x1xf32>
    %131 = arith.mulf %130, %129 : vector<8x1xf32>
    %132 = math.tanh %131 : vector<8x1xf32>
    %cst_68 = arith.constant 1.000000e+00 : f32
    %133 = vector.broadcast %cst_68 : f32 to vector<8x1xf32>
    %134 = arith.addf %132, %133 : vector<8x1xf32>
    %cst_69 = arith.constant 5.000000e-01 : f32
    %135 = vector.broadcast %cst_69 : f32 to vector<8x1xf32>
    %136 = arith.mulf %135, %134 : vector<8x1xf32>
    %137 = vector.broadcast %136 : vector<8x1xf32> to vector<8x256xf32>
    %138 = arith.mulf %115, %137 : vector<8x256xf32>
    %cst_70 = arith.constant 0.000000e+00 : f32
    %139 = vector.broadcast %cst_70 : f32 to vector<8x256xf32>
    %140 = arith.maximumf %138, %139 : vector<8x256xf32>
    %c0_71 = arith.constant 0 : index
    %c0_72 = arith.constant 0 : index
    %c0_73 = arith.constant 0 : index
    %141 = vector.load %arg9[%c0_71, %c0_72, %c0_73] : memref<1x8x256xf32, #tpu.memory_space<vmem>>, vector<1x8x256xf32>
    %142 = vector.shape_cast %141 : vector<1x8x256xf32> to vector<8x256xf32>
    %143 = vector.shape_cast %140 : vector<8x256xf32> to vector<1x8x256xf32>
    tpu.vector_store %arg9[%c0_71, %c0_72, %c0_73], %143 {strides = array<i32>} : memref<1x8x256xf32, #tpu.memory_space<vmem>>, vector<1x8x256xf32>,
    return
  }
  func.func @transform_0(%arg0: i32) -> (i32, i32, i32) {
    %c0_i32 = arith.constant 0 : i32
    %c0_i32_0 = arith.constant 0 : i32
    %c0_i32_1 = arith.constant 0 : i32
    return %arg0, %c0_i32, %c0_i32_0 : i32, i32, i32
  }
  func.func @transform_1(%arg0: i32) -> (i32, i32, i32) {
    %c0_i32 = arith.constant 0 : i32
    %c0_i32_0 = arith.constant 0 : i32
    %c0_i32_1 = arith.constant 0 : i32
    %c0_i32_2 = arith.constant 0 : i32
    return %c0_i32, %c0_i32_0, %c0_i32_1 : i32, i32, i32
  }
  func.func @transform_2(%arg0: i32) -> (i32, i32) {
    %c0_i32 = arith.constant 0 : i32
    %c0_i32_0 = arith.constant 0 : i32
    %c0_i32_1 = arith.constant 0 : i32
    return %c0_i32, %c0_i32_0 : i32, i32
  }
  func.func @transform_3(%arg0: i32) -> (i32, i32) {
    %c0_i32 = arith.constant 0 : i32
    %c0_i32_0 = arith.constant 0 : i32
    %c0_i32_1 = arith.constant 0 : i32
    return %c0_i32, %c0_i32_0 : i32, i32
  }
  func.func @transform_4(%arg0: i32) -> (i32, i32) {
    %c0_i32 = arith.constant 0 : i32
    %c0_i32_0 = arith.constant 0 : i32
    %c0_i32_1 = arith.constant 0 : i32
    return %c0_i32, %c0_i32_0 : i32, i32
  }
  func.func @transform_5(%arg0: i32) -> (i32, i32) {
    %c0_i32 = arith.constant 0 : i32
    %c0_i32_0 = arith.constant 0 : i32
    %c0_i32_1 = arith.constant 0 : i32
    return %c0_i32, %c0_i32_0 : i32, i32
  }
  func.func @transform_6(%arg0: i32) -> (i32, i32) {
    %c0_i32 = arith.constant 0 : i32
    %c0_i32_0 = arith.constant 0 : i32
    %c0_i32_1 = arith.constant 0 : i32
    return %c0_i32, %c0_i32_0 : i32, i32
  }
  func.func @transform_7(%arg0: i32) -> (i32, i32) {
    %c0_i32 = arith.constant 0 : i32
    %c0_i32_0 = arith.constant 0 : i32
    %c0_i32_1 = arith.constant 0 : i32
    return %c0_i32, %c0_i32_0 : i32, i32
  }
  func.func @transform_8(%arg0: i32) -> (i32, i32, i32) {
    %c0_i32 = arith.constant 0 : i32
    %c0_i32_0 = arith.constant 0 : i32
    %c0_i32_1 = arith.constant 0 : i32
    return %arg0, %c0_i32, %c0_i32_0 : i32, i32, i32
  }
}

</mosaic_0001>

<llo_original>
// kernel: conv_gru_forward.1
$region0: #{conv_gru_forward.1}
  #allocation0 [shape = 'u32[]', space=smem, size = 0x4, offset = 0x4, fixed_abs, tag = 'smem constant byte address 0x4 - core index']
  #allocation1 [shape = 'u32[72,128]{1,0:T(1,128)}', space=vmem, size = 0x9000, scoped, tag = 'internal scratch']
  %s0 = inlined_call_operand.vmem [shape: f32[2,4,256], index: 0, kind: input, shape index: {}]
  %s1 = inlined_call_operand.vmem [shape: f32[9,1,256], index: 1, kind: input, shape index: {}]
  %s2 = inlined_call_operand.vmem [shape: bf16[16,36], index: 2, kind: input, shape index: {}]
  %s3 = inlined_call_operand.vmem [shape: f32[16,1], index: 3, kind: input, shape index: {}]
  %s4 = inlined_call_operand.vmem [shape: f32[4,8], index: 4, kind: input, shape index: {}]
  %s5 = inlined_call_operand.vmem [shape: f32[4,1], index: 5, kind: input, shape index: {}]
  %s6 = inlined_call_operand.vmem [shape: f32[8,4], index: 6, kind: input, shape index: {}]
  %s7 = inlined_call_operand.vmem [shape: f32[8,1], index: 7, kind: input, shape index: {}]
  %s8 = inlined_call_operand.vmem [shape: f32[2,8,256], index: 8, kind: output, shape index: {}]
  %s9 = sld [smem:[#allocation0]]
  $region65: #{conv_gru_forward.1} parent=0
    _
  %s11 = ssub.s32 1, %s9
  %s12 = scalar_select 0, %s11, %s9
  loop: start=0, step=1, limit=4
  $region2: #{conv_gru_forward.1} parent=0 // loop_pre_header
    _
  $region3: #{conv_gru_forward.1} parent=0 // loop_header
    %s14 = sphi 0, %s18
    %p15 = scmp.ge.s32.totalorder %s14, 4
    %s24 = sphi 0, %s26
    %s27 = sphi 0, %s24
    %s28 = sphi 0, %s27
    %s44 = sphi 0, %s28
    %s48 = sphi 0, %s48
    %s50 = sphi 0, %s48
    %s51 = sphi 0, %s50
    %s65 = sphi 0, %s51
    %s69 = sphi 0, %s69
    %s71 = sphi 0, %s69
    %s72 = sphi 0, %s71
    %s86 = sphi 0, %s72
    %s90 = sphi 0, %s90
    %s92 = sphi 0, %s90
    %s93 = sphi 0, %s92
    %s107 = sphi 0, %s93
    %s111 = sphi 0, %s111
    %s113 = sphi 0, %s111
    %s114 = sphi 0, %s113
    %s128 = sphi 0, %s114
    %s132 = sphi 0, %s132
    %s134 = sphi 0, %s132
    %s135 = sphi 0, %s134
    %s149 = sphi 0, %s135
    %s153 = sphi 0, %s153
    %s155 = sphi 0, %s153
    %s156 = sphi 0, %s155
    %s170 = sphi 0, %s156
    %s174 = sphi 0, %s174
    %s176 = sphi 0, %s174
    %s177 = sphi 0, %s176
    %s191 = sphi 0, %s177
    %s197 = sphi 0, %s199
    %s200 = sphi 0, %s197
    %s201 = sphi 0, %s200
    %s217 = sphi 0, %s201
  $region4: #{conv_gru_forward.1} parent=0 // loop_header_branch
    %17 = sbr.rel (%p15) target = $region8
  $region5: #{conv_gru_forward.1} parent=0 // loop_body
    %s19 = ssub.s32 %s14, 1
    %s20 = ssub.s32 %s14, 2
    %s21 = sadd.s32 %s14, 1
    %s22 = ssub.s32 %s14, %s21
    %p23 = scmp.eq.s32.totalorder %s22, 0
    %s25 = sadd.s32 %s24, 1
    %s26 = scalar_select %p23, %s24, %s25
    %p29 = pneg %p23
    %p30 = scmp.eq.s32.totalorder %s14, 1
    %p31 = por %p29, %p30
    %p32 = scmp.ne.s32.totalorder %s24, %s27
    %p33 = scmp.eq.s32.totalorder %s14, 0
    %p34 = por %p32, %p33
    %p35 = scmp.ne.s32.totalorder %s24, %s27
    %p36 = scmp.eq.s32.totalorder %s19, 1
    %p37 = por %p35, %p36
    %p38 = scmp.ne.s32.totalorder %s27, %s28
    %p39 = scmp.eq.s32.totalorder %s19, 0
    %p40 = por %p38, %p39
    %p41 = scmp.ne.s32.totalorder %s27, %s28
    %p42 = scmp.eq.s32.totalorder %s20, 1
    %p43 = por %p41, %p42
    %p45 = scmp.ne.s32.totalorder %s28, %s44
    %p46 = scmp.eq.s32.totalorder %s20, 0
    %p47 = por %p45, %p46
    %s49 = sadd.s32 %s48, 1
    %p52 = scmp.eq.s32.totalorder %s14, 1
    %p53 = scmp.ne.s32.totalorder %s48, %s50
    %p54 = scmp.eq.s32.totalorder %s14, 0
    %p55 = por %p53, %p54
    %p56 = scmp.ne.s32.totalorder %s48, %s50
    %p57 = scmp.eq.s32.totalorder %s19, 1
    %p58 = por %p56, %p57
    %p59 = scmp.ne.s32.totalorder %s50, %s51
    %p60 = scmp.eq.s32.totalorder %s19, 0
    %p61 = por %p59, %p60
    %p62 = scmp.ne.s32.totalorder %s50, %s51
    %p63 = scmp.eq.s32.totalorder %s20, 1
    %p64 = por %p62, %p63
    %p66 = scmp.ne.s32.totalorder %s51, %s65
    %p67 = scmp.eq.s32.totalorder %s20, 0
    %p68 = por %p66, %p67
    %s70 = sadd.s32 %s69, 1
    %p73 = scmp.eq.s32.totalorder %s14, 1
    %p74 = scmp.ne.s32.totalorder %s69, %s71
    %p75 = scmp.eq.s32.totalorder %s14, 0
    %p76 = por %p74, %p75
    %p77 = scmp.ne.s32.totalorder %s69, %s71
    %p78 = scmp.eq.s32.totalorder %s19, 1
    %p79 = por %p77, %p78
    %p80 = scmp.ne.s32.totalorder %s71, %s72
    %p81 = scmp.eq.s32.totalorder %s19, 0
    %p82 = por %p80, %p81
    %p83 = scmp.ne.s32.totalorder %s71, %s72
    %p84 = scmp.eq.s32.totalorder %s20, 1
    %p85 = por %p83, %p84
    %p87 = scmp.ne.s32.totalorder %s72, %s86
    %p88 = scmp.eq.s32.totalorder %s20, 0
    %p89 = por %p87, %p88
    %s91 = sadd.s32 %s90, 1
    %p94 = scmp.eq.s32.totalorder %s14, 1
    %p95 = scmp.ne.s32.totalorder %s90, %s92
    %p96 = scmp.eq.s32.totalorder %s14, 0
    %p97 = por %p95, %p96
    %p98 = scmp.ne.s32.totalorder %s90, %s92
    %p99 = scmp.eq.s32.totalorder %s19, 1
    %p100 = por %p98, %p99
    %p101 = scmp.ne.s32.totalorder %s92, %s93
    %p102 = scmp.eq.s32.totalorder %s19, 0
    %p103 = por %p101, %p102
    %p104 = scmp.ne.s32.totalorder %s92, %s93
    %p105 = scmp.eq.s32.totalorder %s20, 1
    %p106 = por %p104, %p105
    %p108 = scmp.ne.s32.totalorder %s93, %s107
    %p109 = scmp.eq.s32.totalorder %s20, 0
    %p110 = por %p108, %p109
    %s112 = sadd.s32 %s111, 1
    %p115 = scmp.eq.s32.totalorder %s14, 1
    %p116 = scmp.ne.s32.totalorder %s111, %s113
    %p117 = scmp.eq.s32.totalorder %s14, 0
    %p118 = por %p116, %p117
    %p119 = scmp.ne.s32.totalorder %s111, %s113
    %p120 = scmp.eq.s32.totalorder %s19, 1
    %p121 = por %p119, %p120
    %p122 = scmp.ne.s32.totalorder %s113, %s114
    %p123 = scmp.eq.s32.totalorder %s19, 0
    %p124 = por %p122, %p123
    %p125 = scmp.ne.s32.totalorder %s113, %s114
    %p126 = scmp.eq.s32.totalorder %s20, 1
    %p127 = por %p125, %p126
    %p129 = scmp.ne.s32.totalorder %s114, %s128
    %p130 = scmp.eq.s32.totalorder %s20, 0
    %p131 = por %p129, %p130
    %s133 = sadd.s32 %s132, 1
    %p136 = scmp.eq.s32.totalorder %s14, 1
    %p137 = scmp.ne.s32.totalorder %s132, %s134
    %p138 = scmp.eq.s32.totalorder %s14, 0
    %p139 = por %p137, %p138
    %p140 = scmp.ne.s32.totalorder %s132, %s134
    %p141 = scmp.eq.s32.totalorder %s19, 1
    %p142 = por %p140, %p141
    %p143 = scmp.ne.s32.totalorder %s134, %s135
    %p144 = scmp.eq.s32.totalorder %s19, 0
    %p145 = por %p143, %p144
    %p146 = scmp.ne.s32.totalorder %s134, %s135
    %p147 = scmp.eq.s32.totalorder %s20, 1
    %p148 = por %p146, %p147
    %p150 = scmp.ne.s32.totalorder %s135, %s149
    %p151 = scmp.eq.s32.totalorder %s20, 0
    %p152 = por %p150, %p151
    %s154 = sadd.s32 %s153, 1
    %p157 = scmp.eq.s32.totalorder %s14, 1
    %p158 = scmp.ne.s32.totalorder %s153, %s155
    %p159 = scmp.eq.s32.totalorder %s14, 0
    %p160 = por %p158, %p159
    %p161 = scmp.ne.s32.totalorder %s153, %s155
    %p162 = scmp.eq.s32.totalorder %s19, 1
    %p163 = por %p161, %p162
    %p164 = scmp.ne.s32.totalorder %s155, %s156
    %p165 = scmp.eq.s32.totalorder %s19, 0
    %p166 = por %p164, %p165
    %p167 = scmp.ne.s32.totalorder %s155, %s156
    %p168 = scmp.eq.s32.totalorder %s20, 1
    %p169 = por %p167, %p168
    %p171 = scmp.ne.s32.totalorder %s156, %s170
    %p172 = scmp.eq.s32.totalorder %s20, 0
    %p173 = por %p171, %p172
    %s175 = sadd.s32 %s174, 1
    %p178 = scmp.eq.s32.totalorder %s14, 1
    %p179 = scmp.ne.s32.totalorder %s174, %s176
    %p180 = scmp.eq.s32.totalorder %s14, 0
    %p181 = por %p179, %p180
    %p182 = scmp.ne.s32.totalorder %s174, %s176
    %p183 = scmp.eq.s32.totalorder %s19, 1
    %p184 = por %p182, %p183
    %p185 = scmp.ne.s32.totalorder %s176, %s177
    %p186 = scmp.eq.s32.totalorder %s19, 0
    %p187 = por %p185, %p186
    %p188 = scmp.ne.s32.totalorder %s176, %s177
    %p189 = scmp.eq.s32.totalorder %s20, 1
    %p190 = por %p188, %p189
    %p192 = scmp.ne.s32.totalorder %s177, %s191
    %p193 = scmp.eq.s32.totalorder %s20, 0
    %p194 = por %p192, %p193
    %s195 = ssub.s32 %s14, %s21
    %p196 = scmp.eq.s32.totalorder %s195, 0
    %s198 = sadd.s32 %s197, 1
    %s199 = scalar_select %p196, %s197, %s198
    %p202 = pneg %p196
    %p203 = scmp.eq.s32.totalorder %s14, 1
    %p204 = por %p202, %p203
    %p205 = scmp.ne.s32.totalorder %s197, %s200
    %p206 = scmp.eq.s32.totalorder %s14, 0
    %p207 = por %p205, %p206
    %p208 = scmp.ne.s32.totalorder %s197, %s200
    %p209 = scmp.eq.s32.totalorder %s19, 1
    %p210 = por %p208, %p209
    %p211 = scmp.ne.s32.totalorder %s200, %s201
    %p212 = scmp.eq.s32.totalorder %s19, 0
    %p213 = por %p211, %p212
    %p214 = scmp.ne.s32.totalorder %s200, %s201
    %p215 = scmp.eq.s32.totalorder %s20, 1
    %p216 = por %p214, %p215
    %p218 = scmp.ne.s32.totalorder %s201, %s217
    %p219 = scmp.eq.s32.totalorder %s20, 0
    %p220 = por %p218, %p219
    %p221 = scmp.le.s32.totalorder 1, %s14
    %p222 = scmp.lt.s32.totalorder %s14, 3
    %p223 = pnand %p221, %p222
    %p224 = pneg %p223
    // Predicated region
    $region9: #{conv_gru_forward.1} parent=5 // pred_check
      _
    $region10: #{conv_gru_forward.1} parent=5 // pred_check_branch
      %226 = sbr.rel (%p223) target = $region12
    $region11: #{conv_gru_forward.1} parent=5 // pred_region
      %s227 = ssub.s32 %s14, 1
      // Predicated region
      $region13: #{conv_gru_forward.1} parent=11 // pred_check
        %p228 = pneg %p61
      $region14: #{conv_gru_forward.1} parent=11 // pred_check_branch
        %230 = sbr.rel (%p228) target = $region16
      $region15: #{conv_gru_forward.1} parent=11 // pred_region
        _
      $region16: #{conv_gru_forward.1} parent=11 // pred_fallthru
        _
      // Predicated region
      $region17: #{conv_gru_forward.1} parent=11 // pred_check
        %p231 = pneg %p82
      $region18: #{conv_gru_forward.1} parent=11 // pred_check_branch
        %233 = sbr.rel (%p231) target = $region20
      $region19: #{conv_gru_forward.1} parent=11 // pred_region
        _
      $region20: #{conv_gru_forward.1} parent=11 // pred_fallthru
        _
      // Predicated region
      $region21: #{conv_gru_forward.1} parent=11 // pred_check
        %p234 = pneg %p103
      $region22: #{conv_gru_forward.1} parent=11 // pred_check_branch
        %236 = sbr.rel (%p234) target = $region24
      $region23: #{conv_gru_forward.1} parent=11 // pred_region
        _
      $region24: #{conv_gru_forward.1} parent=11 // pred_fallthru
        _
      // Predicated region
      $region25: #{conv_gru_forward.1} parent=11 // pred_check
        %p237 = pneg %p124
      $region26: #{conv_gru_forward.1} parent=11 // pred_check_branch
        %239 = sbr.rel (%p237) target = $region28
      $region27: #{conv_gru_forward.1} parent=11 // pred_region
        _
      $region28: #{conv_gru_forward.1} parent=11 // pred_fallthru
        _
      // Predicated region
      $region29: #{conv_gru_forward.1} parent=11 // pred_check
        %p240 = pneg %p145
      $region30: #{conv_gru_forward.1} parent=11 // pred_check_branch
        %242 = sbr.rel (%p240) target = $region32
      $region31: #{conv_gru_forward.1} parent=11 // pred_region
        _
      $region32: #{conv_gru_forward.1} parent=11 // pred_fallthru
        _
      // Predicated region
      $region33: #{conv_gru_forward.1} parent=11 // pred_check
        %p243 = pneg %p166
      $region34: #{conv_gru_forward.1} parent=11 // pred_check_branch
        %245 = sbr.rel (%p243) target = $region36
      $region35: #{conv_gru_forward.1} parent=11 // pred_region
        _
      $region36: #{conv_gru_forward.1} parent=11 // pred_fallthru
        _
      // Predicated region
      $region37: #{conv_gru_forward.1} parent=11 // pred_check
        %p246 = pneg %p187
      $region38: #{conv_gru_forward.1} parent=11 // pred_check_branch
        %248 = sbr.rel (%p246) target = $region40
      $region39: #{conv_gru_forward.1} parent=11 // pred_region
        _
      $region40: #{conv_gru_forward.1} parent=11 // pred_fallthru
        _
    $region12: #{conv_gru_forward.1} parent=5 // pred_fallthru
      _
    %p249 = scmp.lt.s32.totalorder %s14, 2
    // Predicated region
    $region41: #{conv_gru_forward.1} parent=5 // pred_check
      %p250 = pneg %p249
    $region42: #{conv_gru_forward.1} parent=5 // pred_check_branch
      %252 = sbr.rel (%p250) target = $region44
    $region43: #{conv_gru_forward.1} parent=5 // pred_region
      // Predicated region
      $region45: #{conv_gru_forward.1} parent=43 // pred_check
        %p253 = pneg %p34
      $region46: #{conv_gru_forward.1} parent=43 // pred_check_branch
        %255 = sbr.rel (%p253) target = $region48
      $region47: #{conv_gru_forward.1} parent=43 // pred_region
        %p256 = scmp.lt.s32.totalorder %s14, 1
        %s257 = scalar_select %p256, %s14, 1
        %s258 = smul.addr %s257, 2
        %s259 = smul.addr %s258, 4
        %s260 = scalar_lea.vmem %s0, %s259
      $region48: #{conv_gru_forward.1} parent=43 // pred_fallthru
        _
    $region44: #{conv_gru_forward.1} parent=5 // pred_fallthru
      _
    %p261 = scmp.le.s32.totalorder 1, %s14
    %p262 = scmp.lt.s32.totalorder %s14, 3
    %p263 = pnand %p261, %p262
    %p264 = pneg %p263
    // Predicated region
    $region49: #{conv_gru_forward.1} parent=5 // pred_check
      _
    $region50: #{conv_gru_forward.1} parent=5 // pred_check_branch
      %266 = sbr.rel (%p263) target = $region52
    $region51: #{conv_gru_forward.1} parent=5 // pred_region
      %s267 = ssub.s32 %s14, 1
      %p268 = scmp.lt.s32.totalorder %s19, 1
      %s269 = scalar_select %p268, %s19, 1
      %s270 = smul.addr %s269, 2
      %s271 = smul.addr %s270, 4
      %s272 = scalar_lea.vmem %s0, %s271
      %p273 = pneg %p40
      %p274 = pneg %p37
      %p275 = pneg %p61
      %p276 = pneg %p58
      %p277 = pneg %p82
      %p278 = pneg %p79
      %p279 = pneg %p103
      %p280 = pneg %p100
      %p281 = pneg %p124
      %p282 = pneg %p121
      %p283 = pneg %p145
      %p284 = pneg %p142
      %p285 = pneg %p166
      %p286 = pneg %p163
      %p287 = pneg %p187
      %p288 = pneg %p184
      %p289 = pneg %p213
      %p290 = pneg %p210
      %p291 = scmp.lt.s32.totalorder %s19, 1
      %s292 = scalar_select %p291, %s19, 1
      %s293 = smul.addr %s292, 2
      %s294 = smul.addr %s293, 8
      %s295 = scalar_lea.vmem %s8, %s294
      %p296 = scmp.lt.s32.totalorder %s19, 1
      %s297 = scalar_select %p296, %s19, 1
      %s298 = smul.addr %s297, 2
      %s299 = smul.addr %s298, 4
      %s300 = scalar_lea.vmem %s0, %s299
      %p301 = scmp.lt.s32.totalorder %s19, 1
      %s302 = scalar_select %p301, %s19, 1
      %s303 = smul.addr %s302, 2
      %s304 = smul.addr %s303, 8
      %s305 = scalar_lea.vmem %s8, %s304
      %v307 = vld [vmem:[%s300] sm:$0xff]
      %309 = vst [vmem:[#allocation1] ss:$2 sm:$0xff] %v307
      %v310 = vld.sshfl [vmem:[#allocation1] sm:$0xff pattern:$0x75316420]
      %v311 = vld.sshfl [vmem:[#allocation1 + $0x8] sm:$0xff pattern:$0x75316420]
      %312 = vrot.lane.b32.xlu0 %v310, 17
      %v313 = vpop.permute.xlu0 %312
      %314 = vrot.lane.b32.xlu0 %v311, 17
      %v315 = vpop.permute.xlu0 %314
      %vm316 = vcmask 138240
      %v317 = vsel %vm316, %v313, %v315
      %v320 = vsel %vm316, 0.0, %v313
      %v321 = vld [vmem:[%s1] sm:$0x3]
      %vm322 = vcmp.gt.f32.partialorder %v321, 0.0
      %v323 = vsel %vm322, 1, 0
      %v324 = vperm.slane %v323, 0
      %v325 = vperm.slane %v323, 1
      %vm326 = vcmp.eq.s32.totalorder %v324, 1
      %vm327 = vcmp.eq.s32.totalorder %v325, 1
      %v328 = vsel %vm326, %v320, 0.0
      %v329 = vsel %vm327, %v317, 0.0
      %330 = vst [vmem:[#allocation1] ss:$2 sm:$0xff] %v307
      %v331 = vld.sshfl [vmem:[#allocation1] sm:$0xff pattern:$0x75316420]
      %v332 = vld.sshfl [vmem:[#allocation1 + $0x8] sm:$0xff pattern:$0x75316420]
      %333 = vrot.lane.b32.xlu0 %v331, 16
      %v334 = vpop.permute.xlu0 %333
      %335 = vrot.lane.b32.xlu0 %v332, 16
      %v336 = vpop.permute.xlu0 %335
      %vm337 = vcmask 130048
      %v338 = vsel %vm337, %v334, %v336
      %v341 = vsel %vm337, 0.0, %v334
      %s342 = scalar_lea.vmem %s1, 2
      %v343 = vld [vmem:[%s342] sm:$0x3]
      %vm344 = vcmp.gt.f32.partialorder %v343, 0.0
      %v345 = vsel %vm344, 1, 0
      %v346 = vperm.slane %v345, 0
      %v347 = vperm.slane %v345, 1
      %vm348 = vcmp.eq.s32.totalorder %v346, 1
      %vm349 = vcmp.eq.s32.totalorder %v347, 1
      %v350 = vsel %vm348, %v341, 0.0
      %v351 = vsel %vm349, %v338, 0.0
      %352 = vst [vmem:[#allocation1] ss:$2 sm:$0xff] %v307
      %v353 = vld.sshfl [vmem:[#allocation1] sm:$0xff pattern:$0x75316420]
      %v354 = vld.sshfl [vmem:[#allocation1 + $0x8] sm:$0xff pattern:$0x75316420]
      %355 = vrot.lane.b32.xlu0 %v353, 15
      %v356 = vpop.permute.xlu0 %355
      %357 = vrot.lane.b32.xlu0 %v354, 15
      %v358 = vpop.permute.xlu0 %357
      %vm359 = vcmask 121856
      %v360 = vsel %vm359, %v356, %v358
      %v363 = vsel %vm359, 0.0, %v356
      %s364 = scalar_lea.vmem %s1, 4
      %v365 = vld [vmem:[%s364] sm:$0x3]
      %vm366 = vcmp.gt.f32.partialorder %v365, 0.0
      %v367 = vsel %vm366, 1, 0
      %v368 = vperm.slane %v367, 0
      %v369 = vperm.slane %v367, 1
      %vm370 = vcmp.eq.s32.totalorder %v368, 1
      %vm371 = vcmp.eq.s32.totalorder %v369, 1
      %v372 = vsel %vm370, %v363, 0.0
      %v373 = vsel %vm371, %v360, 0.0
      %374 = vst [vmem:[#allocation1] ss:$2 sm:$0xff] %v307
      %v375 = vld.sshfl [vmem:[#allocation1] sm:$0xff pattern:$0x75316420]
      %v376 = vld.sshfl [vmem:[#allocation1 + $0x8] sm:$0xff pattern:$0x75316420]
      %377 = vrot.lane.b32.xlu0 %v375, 1
      %v378 = vpop.permute.xlu0 %377
      %379 = vrot.lane.b32.xlu0 %v376, 1
      %v380 = vpop.permute.xlu0 %379
      %vm381 = vcmask 7168
      %v382 = vsel %vm381, %v378, %v380
      %v385 = vsel %vm381, 0.0, %v378
      %s386 = scalar_lea.vmem %s1, 6
      %v387 = vld [vmem:[%s386] sm:$0x3]
      %vm388 = vcmp.gt.f32.partialorder %v387, 0.0
      %v389 = vsel %vm388, 1, 0
      %v390 = vperm.slane %v389, 0
      %v391 = vperm.slane %v389, 1
      %vm392 = vcmp.eq.s32.totalorder %v390, 1
      %vm393 = vcmp.eq.s32.totalorder %v391, 1
      %v394 = vsel %vm392, %v385, 0.0
      %v395 = vsel %vm393, %v382, 0.0
      %s396 = scalar_lea.vmem %s1, 8
      %v397 = vld [vmem:[%s396] sm:$0x3]
      %vm398 = vcmp.gt.f32.partialorder %v397, 0.0
      %v399 = vsel %vm398, 1, 0
      %v400 = vperm.slane %v399, 0
      %v401 = vperm.slane %v399, 1
      %vm402 = vcmp.eq.s32.totalorder %v400, 1
      %vm403 = vcmp.eq.s32.totalorder %v401, 1
      %404 = vst [vmem:[#allocation1] ss:$2 sm:$0xff] %v307
      %v405 = vld.sshfl [vmem:[#allocation1] sm:$0xff pattern:$0x75316420]
      %v406 = vld.sshfl [vmem:[#allocation1 + $0x8] sm:$0xff pattern:$0x75316420]
      %v409 = vsel %vm402, %v405, 0.0
      %v410 = vsel %vm403, %v406, 0.0
      %411 = vst [vmem:[#allocation1] ss:$2 sm:$0xff] %v307
      %v412 = vld.sshfl [vmem:[#allocation1] sm:$0xff pattern:$0x75316420]
      %v413 = vld.sshfl [vmem:[#allocation1 + $0x8] sm:$0xff pattern:$0x75316420]
      %414 = vrot.lane.b32.xlu0 %v412, 127
      %v415 = vpop.permute.xlu0 %414
      %416 = vrot.lane.b32.xlu0 %v413, 127
      %v417 = vpop.permute.xlu0 %416
      %vm418 = vcmask 1039360
      %v419 = vsel %vm418, %v415, %v417
      %v422 = vsel %vm418, %v417, 0.0
      %s423 = scalar_lea.vmem %s1, 10
      %v424 = vld [vmem:[%s423] sm:$0x3]
      %vm425 = vcmp.gt.f32.partialorder %v424, 0.0
      %v426 = vsel %vm425, 1, 0
      %v427 = vperm.slane %v426, 0
      %v428 = vperm.slane %v426, 1
      %vm429 = vcmp.eq.s32.totalorder %v427, 1
      %vm430 = vcmp.eq.s32.totalorder %v428, 1
      %v431 = vsel %vm429, %v419, 0.0
      %v432 = vsel %vm430, %v422, 0.0
      %433 = vst [vmem:[#allocation1] ss:$2 sm:$0xff] %v307
      %v434 = vld.sshfl [vmem:[#allocation1] sm:$0xff pattern:$0x75316420]
      %v435 = vld.sshfl [vmem:[#allocation1 + $0x8] sm:$0xff pattern:$0x75316420]
      %436 = vrot.lane.b32.xlu0 %v434, 113
      %v437 = vpop.permute.xlu0 %436
      %438 = vrot.lane.b32.xlu0 %v435, 113
      %v439 = vpop.permute.xlu0 %438
      %vm440 = vcmask 924672
      %v441 = vsel %vm440, %v437, %v439
      %v444 = vsel %vm440, %v439, 0.0
      %s445 = scalar_lea.vmem %s1, 12
      %v446 = vld [vmem:[%s445] sm:$0x3]
      %vm447 = vcmp.gt.f32.partialorder %v446, 0.0
      %v448 = vsel %vm447, 1, 0
      %v449 = vperm.slane %v448, 0
      %v450 = vperm.slane %v448, 1
      %vm451 = vcmp.eq.s32.totalorder %v449, 1
      %vm452 = vcmp.eq.s32.totalorder %v450, 1
      %v453 = vsel %vm451, %v441, 0.0
      %v454 = vsel %vm452, %v444, 0.0
      %455 = vst [vmem:[#allocation1] ss:$2 sm:$0xff] %v307
      %v456 = vld.sshfl [vmem:[#allocation1] sm:$0xff pattern:$0x75316420]
      %v457 = vld.sshfl [vmem:[#allocation1 + $0x8] sm:$0xff pattern:$0x75316420]
      %458 = vrot.lane.b32.xlu0 %v456, 112
      %v459 = vpop.permute.xlu0 %458
      %460 = vrot.lane.b32.xlu0 %v457, 112
      %v461 = vpop.permute.xlu0 %460
      %vm462 = vcmask 916480
      %v463 = vsel %vm462, %v459, %v461
      %v466 = vsel %vm462, %v461, 0.0
      %s467 = scalar_lea.vmem %s1, 14
      %v468 = vld [vmem:[%s467] sm:$0x3]
      %vm469 = vcmp.gt.f32.partialorder %v468, 0.0
      %v470 = vsel %vm469, 1, 0
      %v471 = vperm.slane %v470, 0
      %v472 = vperm.slane %v470, 1
      %vm473 = vcmp.eq.s32.totalorder %v471, 1
      %vm474 = vcmp.eq.s32.totalorder %v472, 1
      %v475 = vsel %vm473, %v463, 0.0
      %v476 = vsel %vm474, %v466, 0.0
      %477 = vst [vmem:[#allocation1] ss:$2 sm:$0xff] %v307
      %v478 = vld.sshfl [vmem:[#allocation1] sm:$0xff pattern:$0x75316420]
      %v479 = vld.sshfl [vmem:[#allocation1 + $0x8] sm:$0xff pattern:$0x75316420]
      %480 = vrot.lane.b32.xlu0 %v478, 111
      %v481 = vpop.permute.xlu0 %480
      %482 = vrot.lane.b32.xlu0 %v479, 111
      %v483 = vpop.permute.xlu0 %482
      %vm484 = vcmask 908288
      %v485 = vsel %vm484, %v481, %v483
      %v488 = vsel %vm484, %v483, 0.0
      %s489 = scalar_lea.vmem %s1, 16
      %v490 = vld [vmem:[%s489] sm:$0x3]
      %vm491 = vcmp.gt.f32.partialorder %v490, 0.0
      %v492 = vsel %vm491, 1, 0
      %v493 = vperm.slane %v492, 0
      %v494 = vperm.slane %v492, 1
      %vm495 = vcmp.eq.s32.totalorder %v493, 1
      %vm496 = vcmp.eq.s32.totalorder %v494, 1
      %v497 = vsel %vm495, %v485, 0.0
      %v498 = vsel %vm496, %v488, 0.0
      %v501 = vrot.slane %v350, 4
      %v502 = vrot.slane %v351, 4
      %v507 = vrot.slane %v394, 4
      %v508 = vrot.slane %v395, 4
      %v513 = vrot.slane %v431, 4
      %v514 = vrot.slane %v432, 4
      %v519 = vrot.slane %v475, 4
      %v520 = vrot.slane %v476, 4
      %vm523 = vcmask 1043456
      %v524 = vsel %vm523, %v328, %v501
      %v525 = vsel %vm523, %v329, %v502
      %v526 = vsel %vm523, %v372, %v507
      %v527 = vsel %vm523, %v373, %v508
      %v528 = vsel %vm523, %v409, %v513
      %v529 = vsel %vm523, %v410, %v514
      %v530 = vsel %vm523, %v453, %v519
      %v531 = vsel %vm523, %v454, %v520
      %v532 = vpack.c.bf16 %v526, %v524
      %v533 = vpack.c.bf16 %v527, %v525
      %v534 = vpack.c.bf16 %v530, %v528
      %v535 = vpack.c.bf16 %v531, %v529
      %v536 = vpack.c.bf16 %v497, %v497
      %v537 = vpack.c.bf16 %v498, %v498
      %v538 = vld [vmem:[%s2] sm:$0xf]
      %v539 = vld [vmem:[%s2 + $0x4] sm:$0xf]
      %v540 = vld [vmem:[%s3] sm:$0xff]
      %v541 = vld [vmem:[%s3 + $0x8] sm:$0xff]
      %543 = vset.pattern.permute.xlu0 0
      %544 = vperm.xlu0 %543, %v540
      %v545 = vpop.permute.xlu0 %544
      %548 = vset.pattern.permute.xlu0 0
      %549 = vperm.xlu0 %548, %v541
      %v550 = vpop.permute.xlu0 %549
      %v554 = vunpack.c.l.b16 %v538
      %v555 = vunpack.c.l.b16 %v539
      %v556 = vpack.c.b16 %v555, %v554
      %vm557 = vcmask 293888
      %v559 = vsel %vm557, %v556, 0
      %vm561 = vcmask 1041408
      %v563 = vsel %vm561, %v536, 0
      %v566 = vsel %vm561, %v537, 0
      %568 = vmatpush.bf16.msra.mxu0 0
      %569 = vmatpush.bf16.msra.mxu0 0
      %570 = vmatpush.bf16.msra.mxu0 0
      %571 = vmatpush.bf16.msra.mxu0 0
      %572 = vmatpush.bf16.msra.mxu0 0
      %573 = vmatpush.bf16.msra.mxu0 %v563
      %574 = vmatpush.bf16.msra.mxu0 %v534
      %575 = vmatpush.bf16.msra.mxu0 %v532
      %576 = vmatmul.bf16.gmra.mxu0 %v559
      %v577 = vpop.f32.mrf.mxu0
      %v578 = vadd.f32 %v545, %v577
      %v579 = vpop.f32.mrf.mxu0
      %v580 = vadd.f32 %v550, %v579
      %581 = vdwg.mxu0
      %582 = vmatpush.bf16.msra.mxu0 0
      %583 = vmatpush.bf16.msra.mxu0 0
      %584 = vmatpush.bf16.msra.mxu0 0
      %585 = vmatpush.bf16.msra.mxu0 0
      %586 = vmatpush.bf16.msra.mxu0 0
      %587 = vmatpush.bf16.msra.mxu0 %v566
      %588 = vmatpush.bf16.msra.mxu0 %v535
      %589 = vmatpush.bf16.msra.mxu0 %v533
      %590 = vmatmul.bf16.gmra.mxu0 %v559
      %v591 = vpop.f32.mrf.mxu0
      %v592 = vadd.f32 %v545, %v591
      %v593 = vpop.f32.mrf.mxu0
      %v594 = vadd.f32 %v550, %v593
      %595 = vdwg.mxu0
      %v596 = vmul.f32 %v578, 0.5
      %v597 = vmul.f32 %v592, 0.5
      %v598 = vtanh.pop %v596
      %v599 = vtanh.pop %v597
      %v600 = vadd.f32 %v598, 1.0
      %v601 = vadd.f32 %v599, 1.0
      %v602 = vmul.f32 %v600, 0.5
      %v603 = vmul.f32 %v601, 0.5
      %v604 = vtanh.pop %v580
      %v605 = vtanh.pop %v594
      %v606 = vmul.f32 %v602, %v604
      %v607 = vmul.f32 %v603, %v605
      %v608 = vld [vmem:[%s4] sm:$0xf]
      %v609 = vld [vmem:[%s5] sm:$0xf]
      %v610 = vld [vmem:[%s6] sm:$0xff]
      %v611 = vld [vmem:[%s7] sm:$0xff]
      %v612 = vadd.f32 %v606, %v607
      %613 = vadd.xlane.f32.xlu0 %v612
      %v614 = vpop.xlane.xlu0 %613
      %v615 = vmul.f32 %v614, 0.00390625
      %vm616 = vcmask 64512
      %v618 = vsel %vm616, %v608, 0
      %620 = vmatpush.msra.mxu0 0.0
      %621 = vmatpush.msra.mxu0 0.0
      %622 = vmatpush.msra.mxu0 0.0
      %623 = vmatpush.msra.mxu0 0.0
      %624 = vmatpush.msra.mxu0 0.0
      %625 = vmatpush.msra.mxu0 0.0
      %626 = vmatpush.msra.mxu0 0.0
      %627 = vmatpush.msra.mxu0 0.0
      %628 = vmatpush.msra.mxu0 0.0
      %629 = vmatpush.msra.mxu0 0.0
      %630 = vmatpush.msra.mxu0 0.0
      %631 = vmatpush.msra.mxu0 0.0
      %632 = vmatpush.msra.mxu0 0.0
      %633 = vmatpush.msra.mxu0 0.0
      %634 = vmatpush.msra.mxu0 0.0
      %635 = vmatpush.msra.mxu0 %v615
      %636 = vmatmul.f32.gmra.mxu0 %v618
      %v637 = vpop.f32.mrf.mxu0
      %v638 = vadd.f32 %v609, %v637
      %639 = vdwg.mxu0
      %v640 = vmax.f32 %v638, 0.0
      %vm641 = vcmask 31744
      %v643 = vsel %vm641, %v610, 0
      %v646 = vsel %vm523, %v640, 0
      %648 = vmatpush.msra.mxu0 0.0
      %649 = vmatpush.msra.mxu0 0.0
      %650 = vmatpush.msra.mxu0 0.0
      %651 = vmatpush.msra.mxu0 0.0
      %652 = vmatpush.msra.mxu0 0.0
      %653 = vmatpush.msra.mxu0 0.0
      %654 = vmatpush.msra.mxu0 0.0
      %655 = vmatpush.msra.mxu0 0.0
      %656 = vmatpush.msra.mxu0 0.0
      %657 = vmatpush.msra.mxu0 0.0
      %658 = vmatpush.msra.mxu0 0.0
      %659 = vmatpush.msra.mxu0 0.0
      %660 = vmatpush.msra.mxu0 0.0
      %661 = vmatpush.msra.mxu0 0.0
      %662 = vmatpush.msra.mxu0 0.0
      %663 = vmatpush.msra.mxu0 %v646
      %664 = vmatmul.f32.gmra.mxu0 %v643
      %v665 = vpop.f32.mrf.mxu0
      %v666 = vadd.f32 %v611, %v665
      %667 = vdwg.mxu0
      %v668 = vmul.f32 %v666, 0.5
      %v669 = vtanh.pop %v668
      %v670 = vadd.f32 %v669, 1.0
      %v671 = vmul.f32 %v670, 0.5
      %673 = vset.pattern.permute.xlu0 0
      %674 = vperm.xlu0 %673, %v671
      %v675 = vpop.permute.xlu0 %674
      %v677 = vmul.f32 %v606, %v675
      %v678 = vmul.f32 %v607, %v675
      %v679 = vmax.f32 %v677, 0.0
      %v680 = vmax.f32 %v678, 0.0
      %681 = vst [vmem:[%s305] sm:$0xff] %v679
      %682 = vst [vmem:[%s305 + $0x8] sm:$0xff] %v680
      %p683 = scmp.lt.s32.totalorder %s19, 1
      %s684 = scalar_select %p683, %s19, 1
      %s685 = smul.addr %s684, 2
      %s686 = smul.addr %s685, 8
      %s687 = scalar_lea.vmem %s8, %s686
      // Predicated region
      $region53: #{conv_gru_forward.1} parent=51 // pred_check
        %p688 = pneg %p210
      $region54: #{conv_gru_forward.1} parent=51 // pred_check_branch
        %690 = sbr.rel (%p688) target = $region56
      $region55: #{conv_gru_forward.1} parent=51 // pred_region
        _
      $region56: #{conv_gru_forward.1} parent=51 // pred_fallthru
        _
    $region52: #{conv_gru_forward.1} parent=5 // pred_fallthru
      _
    %p691 = scmp.le.s32.totalorder 2, %s14
    // Predicated region
    $region57: #{conv_gru_forward.1} parent=5 // pred_check
      %p692 = pneg %p691
    $region58: #{conv_gru_forward.1} parent=5 // pred_check_branch
      %694 = sbr.rel (%p692) target = $region60
    $region59: #{conv_gru_forward.1} parent=5 // pred_region
      %s695 = ssub.s32 %s14, 2
      // Predicated region
      $region61: #{conv_gru_forward.1} parent=59 // pred_check
        %p696 = pneg %p216
      $region62: #{conv_gru_forward.1} parent=59 // pred_check_branch
        %698 = sbr.rel (%p696) target = $region64
      $region63: #{conv_gru_forward.1} parent=59 // pred_region
        %p699 = scmp.lt.s32.totalorder %s20, 1
        %s700 = scalar_select %p699, %s20, 1
        %s701 = smul.addr %s700, 2
        %s702 = smul.addr %s701, 8
        %s703 = scalar_lea.vmem %s8, %s702
      $region64: #{conv_gru_forward.1} parent=59 // pred_fallthru
        _
    $region60: #{conv_gru_forward.1} parent=5 // pred_fallthru
      _
  $region6: #{conv_gru_forward.1} parent=0 // loop_footer
    %s18 = sadd.s32 1, %s14
  $region7: #{conv_gru_forward.1} parent=0 // loop_footer_branch
    %13 = sbr.rel target = $region3
  $region8: #{conv_gru_forward.1} parent=0 // loop_exit
    _

</llo_original>
